<compile_context>
chip_gen: v6e
topology: v6e:2x2x1
jax: 0.10.0
libtpu: 0.0.40
codegen_flags: <defaults>
</compile_context>

<pallas_src>
import jax
import jax.numpy as jnp
import numpy as np
from jax.experimental import pallas as pl
from jax.experimental.pallas import tpu as pltpu

LANE = 128            # output lane width (points per slab row)
MAX_TILE_ROWS = 2048  # rows per grid step for large N (1 MiB f32 per block)
FILL_ROWS = 256       # rows per in-kernel store chunk (32 vregs)


def single_variance_kernel(var_ref, out_ref):
    # var_ref: (1, 1) float32 in SMEM.  Compute exp(10 * variance) once per
    # tile on a single vreg (one EUP op), then fill the lane-dense output
    # block with unmasked full-vreg stores, in chunks of <= FILL_ROWS rows so
    # the broadcast never materializes more than 32 vregs at a time.
    s = jnp.exp(jnp.full((1, 1), var_ref[0, 0], jnp.float32) * 10.0)  # (1, 1)

    tile_rows, lane = out_ref.shape  # static per-block shape
    if tile_rows <= FILL_ROWS:
        out_ref[...] = jnp.broadcast_to(s, (tile_rows, lane))
    else:
        fill = jnp.broadcast_to(s, (FILL_ROWS, lane))   # hoisted, replicated layout
        n_full = tile_rows // FILL_ROWS
        for c in range(n_full):                         # static, fully unrolled
            out_ref[c * FILL_ROWS:(c + 1) * FILL_ROWS, :] = fill
        rem = tile_rows - n_full * FILL_ROWS
        if rem:
            out_ref[n_full * FILL_ROWS:, :] = jnp.broadcast_to(s, (rem, lane))


def single_variance_forward(x, variance):
    """x: (N, ...) -- only len(x) matters.  Returns (N, 1) float32."""
    n = x.shape[0]
    rows = max(pl.cdiv(n, LANE), 1)  # rows of the lane-dense (rows, 128) slab

    if rows <= 8:
        # Tiny batch: one full-extent block (block_shape == array shape is
        # always legal, even when rows < 8).
        tile_rows = rows
    else:
        # Split into >= 2 blocks so the "parallel" grid axis shards across
        # both v7x TensorCores; cap the block at MAX_TILE_ROWS.  tile_rows is
        # a multiple of 8, so the (8, 128) divisibility rule holds and Pallas
        # handles a partial final block without any padded HBM allocation.
        half = -(-rows // 2)                       # cdiv(rows, 2)
        tile_rows = min(MAX_TILE_ROWS, ((half + 7) // 8) * 8)
    grid = (pl.cdiv(rows, tile_rows),)

    var2d = jnp.reshape(variance, (1, 1)).astype(jnp.float32)

    slab = pl.pallas_call(
        single_variance_kernel,
        out_shape=jax.ShapeDtypeStruct((rows, LANE), jnp.float32),
        grid_spec=pltpu.PrefetchScalarGridSpec(
            num_scalar_prefetch=0,
            grid=grid,
            # variance lives in SMEM: no VMEM tiling / double-buffering for it.
            in_specs=[pl.BlockSpec(memory_space=pltpu.MemorySpace.SMEM)],
            out_specs=pl.BlockSpec((tile_rows, LANE), lambda i: (i, 0)),
        ),
        compiler_params=pltpu.CompilerParams(
            dimension_semantics=("parallel",)),
    )(var2d)

    if n == rows * LANE:
        # Fast path: contiguous slab -> (N, 1) is a free reshape, no copy.
        return slab.reshape(n, 1)
    # Ragged N: drop the lane padding of the final row.
    return slab.reshape(-1)[:n].reshape(n, 1)


if __name__ == "__main__":
    key = jax.random.PRNGKey(0)
    # self.variance = nn.Parameter(torch.tensor(init_val)) with init_val = 0.3
    variance = jnp.asarray(0.3, jnp.float32)
    expected = np.exp(0.3 * 10.0)

    fwd = jax.jit(single_variance_forward)

    # Small ragged batch (N=8): single full-extent block + slice fallback path.
    x_small = jax.random.uniform(key, (8, 3), jnp.float32, minval=-1.0, maxval=1.0)
    out_small = fwd(x_small, variance)
    jax.block_until_ready(out_small)
    assert out_small.shape == (8, 1) and out_small.dtype == jnp.float32
    np.testing.assert_allclose(np.asarray(out_small),
                               np.full((8, 1), expected, np.float32), rtol=1e-5)

    # Lane-aligned batch (N=2560 -> rows=20): >=2 grid steps, partial final
    # block, and the no-copy reshape fast path.
    x_big = jax.random.uniform(key, (2560, 3), jnp.float32, minval=-1.0, maxval=1.0)
    out_big = fwd(x_big, variance)
    jax.block_until_ready(out_big)
    assert out_big.shape == (2560, 1) and out_big.dtype == jnp.float32
    np.testing.assert_allclose(np.asarray(out_big),
                               np.full((2560, 1), expected, np.float32), rtol=1e-5)

    print("KERNEL_OK")
</pallas_src>

<mosaic_0001>
module attributes {stable_mosaic.version = 11 : i64} {
  func.func @single_variance_kernel(%arg0: i32, %arg1: memref<1x1xf32, #tpu.memory_space<smem>>, %arg2: memref<1x128xf32, #tpu.memory_space<vmem>>) attributes {dimension_semantics = [#tpu.dimension_semantics<parallel>], iteration_bounds = array<i64: 1>, scalar_prefetch = 0 : i64, scratch_operands = 0 : i64, tpu.core_type = #tpu.core_type<tc>, window_params = [{transform_indices = @transform_0, window_bounds = array<i64: 1, 1>}, {transform_indices = @transform_1, window_bounds = array<i64: 1, 128>}]} {
    %c0 = arith.constant 0 : index
    %c0_0 = arith.constant 0 : index
    %0 = memref.load %arg1[%c0, %c0_0] : memref<1x1xf32, #tpu.memory_space<smem>>
    %1 = vector.broadcast %0 : f32 to vector<1x1xf32>
    %cst = arith.constant 1.000000e+01 : f32
    %2 = vector.broadcast %cst : f32 to vector<1x1xf32>
    %3 = arith.mulf %1, %2 : vector<1x1xf32>
    %4 = math.exp %3 : vector<1x1xf32>
    %5 = vector.shape_cast %4 : vector<1x1xf32> to vector<1x1xf32>
    %6 = vector.broadcast %5 : vector<1x1xf32> to vector<1x128xf32>
    %c0_1 = arith.constant 0 : index
    %c0_2 = arith.constant 0 : index
    %7 = vector.load %arg2[%c0_1, %c0_2] : memref<1x128xf32, #tpu.memory_space<vmem>>, vector<1x128xf32>
    tpu.vector_store %arg2[%c0_1, %c0_2], %6 {strides = array<i32>} : memref<1x128xf32, #tpu.memory_space<vmem>>, vector<1x128xf32>,
    return
  }
  func.func @transform_0(%arg0: i32) -> (i32, i32) {
    %c0_i32 = arith.constant 0 : i32
    %c0_i32_0 = arith.constant 0 : i32
    %c0_i32_1 = arith.constant 0 : i32
    return %c0_i32, %c0_i32_0 : i32, i32
  }
  func.func @transform_1(%arg0: i32) -> (i32, i32) {
    %c0_i32 = arith.constant 0 : i32
    %c0_i32_0 = arith.constant 0 : i32
    return %arg0, %c0_i32 : i32, i32
  }
}

</mosaic_0001>

<llo_original>
// kernel: single_variance_forward.1
$region0: #{single_variance_forward.1}
  #allocation0 [shape = 'u32[]', space=smem, size = 0x4, offset = 0x4, fixed_abs, tag = 'smem constant byte address 0x4 - core index']
  #allocation1 [shape = 'u32[144,128]{1,0:T(1,128)}', space=vmem, size = 0x12000, scoped, tag = 'internal scratch']
  #allocation2 [shape = 'f32[1,1]{1,0:T(1,128)S(6)}', space=smem, size = 0x200, scoped, tag = 'scoped memory for single_variance_forward.1']
  %s0 = inlined_call_operand.<no memory space> [shape: f32[1,1], index: 0, kind: input, shape index: {}]
  %s1 = inlined_call_operand.vmem [shape: f32[1,128], index: 1, kind: output, shape index: {}]
  %s2 = sld [smem:[#allocation0]]
  $region14: #{single_variance_forward.1} parent=0
    _
  %s4 = ssub.s32 1, %s2
  %s5 = scalar_select 0, %s4, %s2
  %6 = sst [smem:[#allocation2]] %s0
  // Predicated region
  $region2: #{single_variance_forward.1} parent=0 // pred_check
    _
  $region3: #{single_variance_forward.1} parent=0 // pred_check_branch
    %8 = sbr.rel (0) target = $region5
  $region4: #{single_variance_forward.1} parent=0 // pred_region
    _
  $region5: #{single_variance_forward.1} parent=0 // pred_fallthru
    _
  %s9 = sld [smem:[#allocation2]]
  %v10 = vstv %s9
  %v11 = vmul.f32 %v10, 10.0
  %v12 = vmul.f32 %v11, 1.442695
  %v13 = vpow.pop %v12
  %14 = vst [vmem:[%s1] sm:$0x1] %v13
  // Predicated region
  $region6: #{single_variance_forward.1} parent=0 // pred_check
    _
  $region7: #{single_variance_forward.1} parent=0 // pred_check_branch
    %16 = sbr.rel (0) target = $region9
  $region8: #{single_variance_forward.1} parent=0 // pred_region
    _
  $region9: #{single_variance_forward.1} parent=0 // pred_fallthru
    _
  // Predicated region
  $region10: #{single_variance_forward.1} parent=0 // pred_check
    _
  $region11: #{single_variance_forward.1} parent=0 // pred_check_branch
    %18 = sbr.rel (0) target = $region13
  $region12: #{single_variance_forward.1} parent=0 // pred_region
    _
  $region13: #{single_variance_forward.1} parent=0 // pred_fallthru
    _

</llo_original>
